<compile_context>
chip_gen: v7x
topology: tpu7x:2x2x1
jax: 0.10.0
libtpu: 0.0.40
codegen_flags: <defaults>
</compile_context>

<pallas_src>
import jax
import jax.numpy as jnp
from jax.experimental import pallas as pl
from jax.experimental.pallas import tpu as pltpu


def attn_decoder_kernel(
    hprev_ref,      # (bb, H)       decoder hidden-state block
    henc_ref,       # (bb, ts, E)   encoder-state tile (pipelined over S)
    whf_ref,        # (H, 4H)       [Wq | Whr | Whz | Whn]
    wk_ref,         # (E, H)
    wi_ref,         # (E, 3H)       [Wir | Wiz | Win]
    rows_ref,       # (8, 4H)       packed 1-row operands (row0: fused bias, row1: bi_cat, row2: wv)
    bv_ref,         # (1, 1) SMEM   w_v bias scalar
    out_ref,        # (bb, H)
    q_sc,           # VMEM (bb, H)   q = hprev @ Wq + (bq + bk)
    gh_sc,          # VMEM (bb, 3H)  hprev @ [Whr|Whz|Whn] + [bhr|bhz|bhn]
    ctx_sc,         # VMEM (bb, E)   context accumulator over S tiles
):
    s = pl.program_id(1)
    bb, ts, E = henc_ref.shape
    H = hprev_ref.shape[1]

    # ---- prologue: single fused hprev-side matmul (q + all three GRU hidden gates) ----
    @pl.when(s == 0)
    def _():
        qg = jnp.dot(hprev_ref[...], whf_ref[...],
                     preferred_element_type=jnp.float32) + rows_ref[0:1, :]      # (bb, 4H)
        q_sc[...] = qg[:, :H]
        gh_sc[...] = qg[:, H:]
        ctx_sc[...] = jnp.zeros_like(ctx_sc)

    # ---- additive attention over this S tile (reference module applies NO softmax) ----
    henc = henc_ref[...]                                                          # (bb, ts, E)
    # NOTE: ts is chosen as a multiple of 8 (or == S) so this flatten is layout-safe.
    k = jnp.dot(henc.reshape(bb * ts, E), wk_ref[...],
                preferred_element_type=jnp.float32).reshape(bb, ts, H)
    e = jnp.tanh(k + q_sc[...][:, None, :])                                       # (bb, ts, H)

    # score = e @ w_v + b_v as a VPU multiply + lane reduce (no N=1 MXU matmul)
    wv = rows_ref[2:3, :H]                                                         # (1, H)
    score = jnp.sum(e * wv, axis=-1, keepdims=True) + bv_ref[0, 0]                 # (bb, ts, 1)

    # partial context: sum over this S tile, accumulated across the grid
    ctx_sc[...] += jnp.sum(score * henc, axis=1)                                   # (bb, E)

    # ---- epilogue: GRU cell on the accumulated context ----
    @pl.when(s == pl.num_programs(1) - 1)
    def _():
        gi = jnp.dot(ctx_sc[...], wi_ref[...],
                     preferred_element_type=jnp.float32) + rows_ref[1:2, :3 * H]   # (bb, 3H)
        gh = gh_sc[...]                                                            # (bb, 3H)
        rz = jax.nn.sigmoid(gi[:, :2 * H] + gh[:, :2 * H])                         # slice the sum
        r = rz[:, :H]
        z = rz[:, H:]
        n = jnp.tanh(gi[:, 2 * H:] + r * gh[:, 2 * H:])
        h = (1.0 - z) * n + z * hprev_ref[...]
        out_ref[...] = h.astype(out_ref.dtype)


def _vmem_capacity_bytes():
    try:
        return int(getattr(pltpu.get_tpu_info(), "vmem_capacity_bytes", 64 << 20))
    except Exception:
        return 64 << 20


def _pick_s_tile(B, S, E, H, budget_bytes):
    # Divisors of S that satisfy the (8,128) sublane constraint on the hidden_enc block.
    cands = [d for d in range(1, S + 1) if S % d == 0 and (d % 8 == 0 or d == S)]
    tile_bytes = lambda ts: 4 * B * ts * (2 * E + 2 * H)  # 2x-buffered henc tile + k/e temps (f32)
    fitting = [d for d in cands if tile_bytes(d) <= budget_bytes]
    return max(fitting) if fitting else min(cands)


def attn_decoder(hidden_prev, hidden_enc, params):
    B, H = hidden_prev.shape
    _, S, E = hidden_enc.shape

    # ---- parameter prep (cheap XLA-side folding/fusion, once per call) ----
    # Fused hprev-side weight [Wq | Whr | Whz | Whn]; bq+bk folded into the q bias block.
    w_hfused = jnp.concatenate(
        [params["wq"], params["whr"], params["whz"], params["whn"]], axis=1)       # (H, 4H)
    b_hfused = jnp.concatenate(
        [params["bq"] + params["bk"], params["bhr"], params["bhz"], params["bhn"]], axis=1)  # (1, 4H)
    wi_cat = jnp.concatenate([params["wir"], params["wiz"], params["win"]], axis=1)  # (E, 3H)
    bi_cat = jnp.concatenate([params["bir"], params["biz"], params["bin"]], axis=1)  # (1, 3H)
    wv_row = params["wv"].reshape(1, H)                                              # (1, H)
    bv = params["bv"].reshape(1, 1)                                                  # (1, 1) -> SMEM

    # Pack all remaining 1-row operands into one (8, 4H) VMEM tile: one DMA instead of three.
    rows = jnp.zeros((8, 4 * H), jnp.float32)
    rows = rows.at[0, :].set(b_hfused[0])
    rows = rows.at[1, :3 * H].set(bi_cat[0])
    rows = rows.at[2, :H].set(wv_row[0])

    # ---- tiling / VMEM budget (v5e/v6e: 128 MiB physical, v7x: 64 MiB) ----
    vmem_cap = _vmem_capacity_bytes()
    vmem_limit = max(32 << 20, min((vmem_cap * 3) // 4, 96 << 20))
    ts = _pick_s_tile(B, S, E, H, budget_bytes=vmem_limit // 4)
    ns = S // ts
    # Shard the batch across 2 TensorCores (v7x megacore) only when it tiles cleanly.
    nb = 2 if (B % 2 == 0 and (B // 2) % 8 == 0) else 1
    bb = B // nb

    return pl.pallas_call(
        attn_decoder_kernel,
        out_shape=jax.ShapeDtypeStruct((B, H), jnp.float32),
        grid=(nb, ns),
        in_specs=[
            pl.BlockSpec((bb, H), lambda b, s: (b, 0)),            # hidden_prev
            pl.BlockSpec((bb, ts, E), lambda b, s: (b, s, 0)),     # hidden_enc (pipelined over S)
            pl.BlockSpec((H, 4 * H), lambda b, s: (0, 0)),         # fused hprev weights
            pl.BlockSpec((E, H), lambda b, s: (0, 0)),             # Wk
            pl.BlockSpec((E, 3 * H), lambda b, s: (0, 0)),         # Wi_cat
            pl.BlockSpec((8, 4 * H), lambda b, s: (0, 0)),         # packed 1-row operands
            pl.BlockSpec(memory_space=pltpu.MemorySpace.SMEM),     # b_v scalar
        ],
        out_specs=pl.BlockSpec((bb, H), lambda b, s: (b, 0)),
        scratch_shapes=[
            pltpu.VMEM((bb, H), jnp.float32),        # q
            pltpu.VMEM((bb, 3 * H), jnp.float32),    # hprev GRU gates
            pltpu.VMEM((bb, E), jnp.float32),        # context accumulator
        ],
        compiler_params=pltpu.CompilerParams(
            dimension_semantics=("parallel", "arbitrary"),
            vmem_limit_bytes=int(vmem_limit),
        ),
    )(hidden_prev, hidden_enc, w_hfused, params["wk"], wi_cat, rows, bv)


def attn_decoder_ref(hidden_prev, hidden_enc, p):
    """Pure-JAX reference matching the PyTorch forward."""
    q = hidden_prev @ p["wq"] + p["bq"]                                # (B, H)
    k = jnp.einsum("bse,eh->bsh", hidden_enc, p["wk"]) + p["bk"]       # (B, S, H)
    e = jnp.tanh(q[:, None, :] + k)                                    # (B, S, H)
    score = jnp.einsum("bsh,ho->bso", e, p["wv"]) + p["bv"]            # (B, S, 1)
    context = jnp.einsum("bs,bse->be", score[..., 0], hidden_enc)      # (B, E)

    r = jax.nn.sigmoid(context @ p["wir"] + p["bir"] + hidden_prev @ p["whr"] + p["bhr"])
    z = jax.nn.sigmoid(context @ p["wiz"] + p["biz"] + hidden_prev @ p["whz"] + p["bhz"])
    n = jnp.tanh(context @ p["win"] + p["bin"] + r * (hidden_prev @ p["whn"] + p["bhn"]))
    return (1.0 - z) * n + z * hidden_prev


def init_params(key, enc_hidden_size, hidden_size):
    E, H = enc_hidden_size, hidden_size
    keys = jax.random.split(key, 20)
    g = lambda k, shape: (0.1 * jax.random.normal(k, shape, dtype=jnp.float32))
    return {
        # attention projections (already transposed: (in, out))
        "wq": g(keys[0], (H, H)), "bq": g(keys[1], (1, H)),
        "wk": g(keys[2], (E, H)), "bk": g(keys[3], (1, H)),
        "wv": g(keys[4], (H, 1)), "bv": g(keys[5], (1, 1)),
        # GRUCell input weights (E -> H per gate)
        "wir": g(keys[6], (E, H)), "wiz": g(keys[7], (E, H)), "win": g(keys[8], (E, H)),
        "bir": g(keys[9], (1, H)), "biz": g(keys[10], (1, H)), "bin": g(keys[11], (1, H)),
        # GRUCell hidden weights (H -> H per gate)
        "whr": g(keys[12], (H, H)), "whz": g(keys[13], (H, H)), "whn": g(keys[14], (H, H)),
        "bhr": g(keys[15], (1, H)), "bhz": g(keys[16], (1, H)), "bhn": g(keys[17], (1, H)),
    }


if __name__ == "__main__":
    B, S = 2, 8
    ENC_HIDDEN, HIDDEN = 32, 32

    key = jax.random.PRNGKey(0)
    k_prev, k_enc, k_params = jax.random.split(key, 3)

    hidden_prev = jax.random.normal(k_prev, (B, HIDDEN), dtype=jnp.float32)
    hidden_enc = jax.random.normal(k_enc, (B, S, ENC_HIDDEN), dtype=jnp.float32)
    params = init_params(k_params, ENC_HIDDEN, HIDDEN)

    out = attn_decoder(hidden_prev, hidden_enc, params)
    out = jax.block_until_ready(out)

    ref = attn_decoder_ref(hidden_prev, hidden_enc, params)
    assert out.shape == (B, HIDDEN)
    assert jnp.allclose(out, ref, rtol=1e-5, atol=1e-5), "Pallas kernel mismatch vs reference"

    print("KERNEL_OK")
</pallas_src>

<mosaic_0001>
module attributes {stable_mosaic.version = 11 : i64} {
  func.func @attn_decoder_kernel(%arg0: i32, %arg1: i32, %arg2: memref<2x32xf32, #tpu.memory_space<vmem>>, %arg3: memref<2x8x32xf32, #tpu.memory_space<vmem>>, %arg4: memref<32x128xf32, #tpu.memory_space<vmem>>, %arg5: memref<32x32xf32, #tpu.memory_space<vmem>>, %arg6: memref<32x96xf32, #tpu.memory_space<vmem>>, %arg7: memref<8x128xf32, #tpu.memory_space<vmem>>, %arg8: memref<1x1xf32, #tpu.memory_space<smem>>, %arg9: memref<2x32xf32, #tpu.memory_space<vmem>>, %arg10: memref<2x32xf32, #tpu.memory_space<vmem>>, %arg11: memref<2x96xf32, #tpu.memory_space<vmem>>, %arg12: memref<2x32xf32, #tpu.memory_space<vmem>>) attributes {dimension_semantics = [#tpu.dimension_semantics<parallel>, #tpu.dimension_semantics<arbitrary>], iteration_bounds = array<i64: 1, 1>, scalar_prefetch = 0 : i64, scratch_operands = 3 : i64, tpu.core_type = #tpu.core_type<tc>, window_params = [{transform_indices = @transform_0, window_bounds = array<i64: 2, 32>}, {transform_indices = @transform_1, window_bounds = array<i64: 2, 8, 32>}, {pipeline_mode = #tpu.pipeline_mode<synchronous>, transform_indices = @transform_2, window_bounds = array<i64: 32, 128>}, {pipeline_mode = #tpu.pipeline_mode<synchronous>, transform_indices = @transform_3, window_bounds = array<i64: 32, 32>}, {pipeline_mode = #tpu.pipeline_mode<synchronous>, transform_indices = @transform_4, window_bounds = array<i64: 32, 96>}, {pipeline_mode = #tpu.pipeline_mode<synchronous>, transform_indices = @transform_5, window_bounds = array<i64: 8, 128>}, {transform_indices = @transform_6, window_bounds = array<i64: 1, 1>}, {transform_indices = @transform_7, window_bounds = array<i64: 2, 32>}]} {
    %c0_i32 = arith.constant 0 : i32
    %0 = arith.cmpi eq, %arg1, %c0_i32 : i32
    %1 = arith.extui %0 : i1 to i32
    %c0_i32_0 = arith.constant 0 : i32
    %2 = arith.cmpi ne, %1, %c0_i32_0 : i32
    scf.if %2 {
      %c0_18 = arith.constant 0 : index
      %c0_19 = arith.constant 0 : index
      %31 = vector.load %arg2[%c0_18, %c0_19] : memref<2x32xf32, #tpu.memory_space<vmem>>, vector<2x32xf32>
      %c0_20 = arith.constant 0 : index
      %c0_21 = arith.constant 0 : index
      %32 = vector.load %arg4[%c0_20, %c0_21] : memref<32x128xf32, #tpu.memory_space<vmem>>, vector<32x128xf32>
      %cst_22 = arith.constant dense<0.000000e+00> : vector<2x128xf32>
      %33 = tpu.matmul %31, %32, %cst_22 {dimension_numbers = #tpu.dot_dimension_numbers<[1], [0], [0], [1], [0, 0, 1, 1], [], []>} : vector<2x32xf32>, vector<32x128xf32>, vector<2x128xf32> -> vector<2x128xf32>
      %c0_23 = arith.constant 0 : index
      %c0_24 = arith.constant 0 : index
      %34 = vector.load %arg7[%c0_23, %c0_24] : memref<8x128xf32, #tpu.memory_space<vmem>>, vector<1x128xf32>
      %35 = vector.broadcast %34 : vector<1x128xf32> to vector<2x128xf32>
      %36 = arith.addf %33, %35 : vector<2x128xf32>
      %37 = vector.extract_strided_slice %36 {offsets = [0, 0], sizes = [2, 32], strides = [1, 1]} : vector<2x128xf32> to vector<2x32xf32>
      %c0_25 = arith.constant 0 : index
      %c0_26 = arith.constant 0 : index
      %38 = vector.load %arg10[%c0_25, %c0_26] : memref<2x32xf32, #tpu.memory_space<vmem>>, vector<2x32xf32>
      tpu.vector_store %arg10[%c0_25, %c0_26], %37 {strides = array<i32>} : memref<2x32xf32, #tpu.memory_space<vmem>>, vector<2x32xf32>,
      %39 = vector.extract_strided_slice %36 {offsets = [0, 32], sizes = [2, 96], strides = [1, 1]} : vector<2x128xf32> to vector<2x96xf32>
      %c0_27 = arith.constant 0 : index
      %c0_28 = arith.constant 0 : index
      %40 = vector.load %arg11[%c0_27, %c0_28] : memref<2x96xf32, #tpu.memory_space<vmem>>, vector<2x96xf32>
      tpu.vector_store %arg11[%c0_27, %c0_28], %39 {strides = array<i32>} : memref<2x96xf32, #tpu.memory_space<vmem>>, vector<2x96xf32>,
      %cst_29 = arith.constant 0.000000e+00 : f32
      %41 = vector.broadcast %cst_29 : f32 to vector<2x32xf32>
      %c0_30 = arith.constant 0 : index
      %c0_31 = arith.constant 0 : index
      %42 = vector.load %arg12[%c0_30, %c0_31] : memref<2x32xf32, #tpu.memory_space<vmem>>, vector<2x32xf32>
      tpu.vector_store %arg12[%c0_30, %c0_31], %41 {strides = array<i32>} : memref<2x32xf32, #tpu.memory_space<vmem>>, vector<2x32xf32>,
    } else {
    }
    %c0 = arith.constant 0 : index
    %c0_1 = arith.constant 0 : index
    %c0_2 = arith.constant 0 : index
    %3 = vector.load %arg3[%c0, %c0_1, %c0_2] : memref<2x8x32xf32, #tpu.memory_space<vmem>>, vector<2x8x32xf32>
    %4 = vector.shape_cast %3 : vector<2x8x32xf32> to vector<16x32xf32>
    %c0_3 = arith.constant 0 : index
    %c0_4 = arith.constant 0 : index
    %5 = vector.load %arg5[%c0_3, %c0_4] : memref<32x32xf32, #tpu.memory_space<vmem>>, vector<32x32xf32>
    %cst = arith.constant dense<0.000000e+00> : vector<16x32xf32>
    %6 = tpu.matmul %4, %5, %cst {dimension_numbers = #tpu.dot_dimension_numbers<[1], [0], [0], [1], [0, 0, 1, 1], [], []>} : vector<16x32xf32>, vector<32x32xf32>, vector<16x32xf32> -> vector<16x32xf32>
    %7 = vector.shape_cast %6 : vector<16x32xf32> to vector<2x8x32xf32>
    %c0_5 = arith.constant 0 : index
    %c0_6 = arith.constant 0 : index
    %8 = vector.load %arg10[%c0_5, %c0_6] : memref<2x32xf32, #tpu.memory_space<vmem>>, vector<2x32xf32>
    %9 = vector.shape_cast %8 : vector<2x32xf32> to vector<2x1x32xf32>
    %10 = vector.broadcast %9 : vector<2x1x32xf32> to vector<2x8x32xf32>
    %11 = arith.addf %7, %10 : vector<2x8x32xf32>
    %12 = math.tanh %11 : vector<2x8x32xf32>
    %c2 = arith.constant 2 : index
    %c0_7 = arith.constant 0 : index
    %13 = vector.load %arg7[%c2, %c0_7] : memref<8x128xf32, #tpu.memory_space<vmem>>, vector<1x32xf32>
    %14 = vector.shape_cast %13 : vector<1x32xf32> to vector<1x1x32xf32>
    %15 = vector.broadcast %14 : vector<1x1x32xf32> to vector<2x8x32xf32>
    %16 = arith.mulf %12, %15 : vector<2x8x32xf32>
    %cst_8 = arith.constant dense<0.000000e+00> : vector<2x8xf32>
    %17 = vector.multi_reduction <add>, %16, %cst_8 [2] : vector<2x8x32xf32> to vector<2x8xf32>
    %18 = vector.shape_cast %17 : vector<2x8xf32> to vector<2x8x1xf32>
    %c0_9 = arith.constant 0 : index
    %c0_10 = arith.constant 0 : index
    %19 = memref.load %arg8[%c0_9, %c0_10] : memref<1x1xf32, #tpu.memory_space<smem>>
    %20 = vector.broadcast %19 : f32 to vector<2x8x1xf32>
    %21 = arith.addf %18, %20 : vector<2x8x1xf32>
    %c0_11 = arith.constant 0 : index
    %c0_12 = arith.constant 0 : index
    %22 = vector.load %arg12[%c0_11, %c0_12] : memref<2x32xf32, #tpu.memory_space<vmem>>, vector<2x32xf32>
    %23 = vector.broadcast %21 : vector<2x8x1xf32> to vector<2x8x32xf32>
    %24 = arith.mulf %23, %3 : vector<2x8x32xf32>
    %cst_13 = arith.constant dense<0.000000e+00> : vector<2x32xf32>
    %25 = vector.multi_reduction <add>, %24, %cst_13 [1] : vector<2x8x32xf32> to vector<2x32xf32>
    %26 = arith.addf %22, %25 : vector<2x32xf32>
    %c0_14 = arith.constant 0 : index
    %c0_15 = arith.constant 0 : index
    %27 = vector.load %arg12[%c0_14, %c0_15] : memref<2x32xf32, #tpu.memory_space<vmem>>, vector<2x32xf32>
    tpu.vector_store %arg12[%c0_14, %c0_15], %26 {strides = array<i32>} : memref<2x32xf32, #tpu.memory_space<vmem>>, vector<2x32xf32>,
    %c0_i32_16 = arith.constant 0 : i32
    %28 = arith.cmpi eq, %arg1, %c0_i32_16 : i32
    %29 = arith.extui %28 : i1 to i32
    %c0_i32_17 = arith.constant 0 : i32
    %30 = arith.cmpi ne, %29, %c0_i32_17 : i32
    scf.if %30 {
      %c0_18 = arith.constant 0 : index
      %c0_19 = arith.constant 0 : index
      %31 = vector.load %arg12[%c0_18, %c0_19] : memref<2x32xf32, #tpu.memory_space<vmem>>, vector<2x32xf32>
      %c0_20 = arith.constant 0 : index
      %c0_21 = arith.constant 0 : index
      %32 = vector.load %arg6[%c0_20, %c0_21] : memref<32x96xf32, #tpu.memory_space<vmem>>, vector<32x96xf32>
      %cst_22 = arith.constant dense<0.000000e+00> : vector<2x96xf32>
      %33 = tpu.matmul %31, %32, %cst_22 {dimension_numbers = #tpu.dot_dimension_numbers<[1], [0], [0], [1], [0, 0, 1, 1], [], []>} : vector<2x32xf32>, vector<32x96xf32>, vector<2x96xf32> -> vector<2x96xf32>
      %c1 = arith.constant 1 : index
      %c0_23 = arith.constant 0 : index
      %34 = vector.load %arg7[%c1, %c0_23] : memref<8x128xf32, #tpu.memory_space<vmem>>, vector<1x96xf32>
      %35 = vector.broadcast %34 : vector<1x96xf32> to vector<2x96xf32>
      %36 = arith.addf %33, %35 : vector<2x96xf32>
      %c0_24 = arith.constant 0 : index
      %c0_25 = arith.constant 0 : index
      %37 = vector.load %arg11[%c0_24, %c0_25] : memref<2x96xf32, #tpu.memory_space<vmem>>, vector<2x96xf32>
      %38 = vector.extract_strided_slice %36 {offsets = [0, 0], sizes = [2, 64], strides = [1, 1]} : vector<2x96xf32> to vector<2x64xf32>
      %39 = vector.extract_strided_slice %37 {offsets = [0, 0], sizes = [2, 64], strides = [1, 1]} : vector<2x96xf32> to vector<2x64xf32>
      %40 = arith.addf %38, %39 : vector<2x64xf32>
      %41 = arith.negf %40 : vector<2x64xf32>
      %42 = math.exp %41 : vector<2x64xf32>
      %cst_26 = arith.constant 1.000000e+00 : f32
      %43 = vector.broadcast %cst_26 : f32 to vector<2x64xf32>
      %44 = arith.addf %43, %42 : vector<2x64xf32>
      %45 = arith.divf %43, %44 : vector<2x64xf32>
      %46 = vector.extract_strided_slice %45 {offsets = [0, 0], sizes = [2, 32], strides = [1, 1]} : vector<2x64xf32> to vector<2x32xf32>
      %47 = vector.extract_strided_slice %45 {offsets = [0, 32], sizes = [2, 32], strides = [1, 1]} : vector<2x64xf32> to vector<2x32xf32>
      %48 = vector.extract_strided_slice %36 {offsets = [0, 64], sizes = [2, 32], strides = [1, 1]} : vector<2x96xf32> to vector<2x32xf32>
      %49 = vector.extract_strided_slice %37 {offsets = [0, 64], sizes = [2, 32], strides = [1, 1]} : vector<2x96xf32> to vector<2x32xf32>
      %50 = arith.mulf %46, %49 : vector<2x32xf32>
      %51 = arith.addf %48, %50 : vector<2x32xf32>
      %52 = math.tanh %51 : vector<2x32xf32>
      %cst_27 = arith.constant 1.000000e+00 : f32
      %53 = vector.broadcast %cst_27 : f32 to vector<2x32xf32>
      %54 = arith.subf %53, %47 : vector<2x32xf32>
      %55 = arith.mulf %54, %52 : vector<2x32xf32>
      %c0_28 = arith.constant 0 : index
      %c0_29 = arith.constant 0 : index
      %56 = vector.load %arg2[%c0_28, %c0_29] : memref<2x32xf32, #tpu.memory_space<vmem>>, vector<2x32xf32>
      %57 = arith.mulf %47, %56 : vector<2x32xf32>
      %58 = arith.addf %55, %57 : vector<2x32xf32>
      %c0_30 = arith.constant 0 : index
      %c0_31 = arith.constant 0 : index
      %59 = vector.load %arg9[%c0_30, %c0_31] : memref<2x32xf32, #tpu.memory_space<vmem>>, vector<2x32xf32>
      tpu.vector_store %arg9[%c0_30, %c0_31], %58 {strides = array<i32>} : memref<2x32xf32, #tpu.memory_space<vmem>>, vector<2x32xf32>,
    } else {
    }
    return
  }
  func.func @transform_0(%arg0: i32, %arg1: i32) -> (i32, i32) {
    %c0_i32 = arith.constant 0 : i32
    %c0_i32_0 = arith.constant 0 : i32
    return %arg0, %c0_i32 : i32, i32
  }
  func.func @transform_1(%arg0: i32, %arg1: i32) -> (i32, i32, i32) {
    %c0_i32 = arith.constant 0 : i32
    %c0_i32_0 = arith.constant 0 : i32
    return %arg0, %arg1, %c0_i32 : i32, i32, i32
  }
  func.func @transform_2(%arg0: i32, %arg1: i32) -> (i32, i32) {
    %c0_i32 = arith.constant 0 : i32
    %c0_i32_0 = arith.constant 0 : i32
    %c0_i32_1 = arith.constant 0 : i32
    return %c0_i32, %c0_i32_0 : i32, i32
  }
  func.func @transform_3(%arg0: i32, %arg1: i32) -> (i32, i32) {
    %c0_i32 = arith.constant 0 : i32
    %c0_i32_0 = arith.constant 0 : i32
    %c0_i32_1 = arith.constant 0 : i32
    return %c0_i32, %c0_i32_0 : i32, i32
  }
  func.func @transform_4(%arg0: i32, %arg1: i32) -> (i32, i32) {
    %c0_i32 = arith.constant 0 : i32
    %c0_i32_0 = arith.constant 0 : i32
    %c0_i32_1 = arith.constant 0 : i32
    return %c0_i32, %c0_i32_0 : i32, i32
  }
  func.func @transform_5(%arg0: i32, %arg1: i32) -> (i32, i32) {
    %c0_i32 = arith.constant 0 : i32
    %c0_i32_0 = arith.constant 0 : i32
    %c0_i32_1 = arith.constant 0 : i32
    return %c0_i32, %c0_i32_0 : i32, i32
  }
  func.func @transform_6(%arg0: i32, %arg1: i32) -> (i32, i32) {
    %c0_i32 = arith.constant 0 : i32
    %c0_i32_0 = arith.constant 0 : i32
    %c0_i32_1 = arith.constant 0 : i32
    return %c0_i32, %c0_i32_0 : i32, i32
  }
  func.func @transform_7(%arg0: i32, %arg1: i32) -> (i32, i32) {
    %c0_i32 = arith.constant 0 : i32
    %c0_i32_0 = arith.constant 0 : i32
    return %arg0, %c0_i32 : i32, i32
  }
}

</mosaic_0001>

<llo_original>
// kernel: tpu_custom_call.1
$region0: #{tpu_custom_call.1}
  #allocation0 [shape = 'u32[]', space=smem, size = 0x4, offset = 0x4, fixed_abs, tag = 'smem constant byte address 0x4 - core index']
  #allocation1 [shape = 'u32[144,128]{1,0:T(1,128)}', space=vmem, size = 0x12000, scoped, tag = 'internal scratch']
  #allocation2 [shape = 'f32[2,32]{1,0:T(2,128)}', space=vmem, size = 0x400, scoped, tag = 'scratch operand']
  #allocation3 [shape = 'f32[2,96]{1,0:T(2,128)}', space=vmem, size = 0x400, scoped, tag = 'scratch operand']
  #allocation4 [shape = 'f32[2,32]{1,0:T(2,128)}', space=vmem, size = 0x400, scoped, tag = 'scratch operand']
  #allocation5 [shape = 'f32[1,1]{1,0:T(1,128)S(6)}', space=smem, size = 0x200, scoped, tag = 'scoped memory for tpu_custom_call.1']
  %s0 = inlined_call_operand.vmem [shape: f32[2,32], index: 0, kind: input, shape index: {}]
  %s1 = inlined_call_operand.hbm [shape: f32[2,8,32], index: 1, kind: input, shape index: {}]
  %s2 = inlined_call_operand.hbm [shape: f32[32,128], index: 2, kind: input, shape index: {}]
  %s3 = inlined_call_operand.hbm [shape: f32[32,32], index: 3, kind: input, shape index: {}]
  %s4 = inlined_call_operand.hbm [shape: f32[32,96], index: 4, kind: input, shape index: {}]
  %s5 = inlined_call_operand.vmem [shape: f32[8,128], index: 5, kind: input, shape index: {}]
  %s6 = inlined_call_operand.<no memory space> [shape: f32[1,1], index: 6, kind: input, shape index: {}]
  %s7 = inlined_call_operand.hbm [shape: f32[2,32], index: 7, kind: output, shape index: {}]
  %s8 = sld [smem:[#allocation0]]
  $region62: #{tpu_custom_call.1} parent=0
    _
  %s10 = ssub.s32 1, %s8
  %s11 = scalar_select 0, %s10, %s8
  %12 = sst [smem:[#allocation5]] %s6
  $region1: #{tpu_custom_call.1} parent=0
    #allocation6 [shape = 'u8[8192]{0}', space=vmem, size = 0x2000, scoped, tag = 'input window, operand 1, single buffered']
    #allocation7 [shape = 's32[1]{0}', space=sflag, size = 0x4, scoped, tag = 'scoped memory for tpu_custom_call.1']
    #allocation8 [shape = 's32[1]{0}', space=sflag, size = 0x4, scoped, tag = 'scoped memory for tpu_custom_call.1']
    #allocation9 [shape = 'u8[16384]{0}', space=vmem, size = 0x4000, scoped, tag = 'input window, operand 2, single buffered']
    #allocation10 [shape = 's32[1]{0}', space=sflag, size = 0x4, scoped, tag = 'scoped memory for tpu_custom_call.1']
    #allocation11 [shape = 'u8[16384]{0}', space=vmem, size = 0x4000, scoped, tag = 'input window, operand 3, single buffered']
    #allocation12 [shape = 'u8[16384]{0}', space=vmem, size = 0x4000, scoped, tag = 'input window, operand 4, single buffered']
    #allocation13 [shape = 's32[1]{0}', space=sflag, size = 0x4, scoped, tag = 'scoped memory for tpu_custom_call.1']
    #allocation14 [shape = 'u8[1024]{0}', space=vmem, size = 0x400, scoped, tag = 'output window, operand 0, single buffered']
    %13 = vsyncpa [#allocation7], 0
    %14 = vsyncpa [#allocation10], 0
    %15 = vsyncpa [#allocation13], 0
    %16 = vsyncpa [#allocation8], 0
    // Predicated region
    $region2: #{tpu_custom_call.1} parent=1 // pred_check
      _
    $region3: #{tpu_custom_call.1} parent=1 // pred_check_branch
      %18 = sbr.rel (0) target = $region5
    $region4: #{tpu_custom_call.1} parent=1 // pred_region
      _
    $region5: #{tpu_custom_call.1} parent=1 // pred_fallthru
      _
    // Predicated region
    $region6: #{tpu_custom_call.1} parent=1 // pred_check
      _
    $region7: #{tpu_custom_call.1} parent=1 // pred_check_branch
      %20 = sbr.rel (0) target = $region9
    $region8: #{tpu_custom_call.1} parent=1 // pred_region
      %s22 = ssub.s32 256, 256
      %23 = vsyncadd [#allocation7], %s22
      %s24 = sshll.u32 [#allocation6], 4
      %s25 = int_to_ptr.vmem [resolvable:$true] %s24
      %30 = dma.hbm_to_vmem [thread:$0]  %s1, 256, %s25, [#allocation7], 128, 128, 8
    $region9: #{tpu_custom_call.1} parent=1 // pred_fallthru
      _
    // Predicated region
    $region10: #{tpu_custom_call.1} parent=1 // pred_check
      _
    $region11: #{tpu_custom_call.1} parent=1 // pred_check_branch
      %32 = sbr.rel (0) target = $region13
    $region12: #{tpu_custom_call.1} parent=1 // pred_region
      %s34 = ssub.s32 512, 512
      %35 = vsyncadd [#allocation10], %s34
      %s36 = sshll.u32 [#allocation9], 4
      %s37 = int_to_ptr.vmem [resolvable:$true] %s36
      %42 = dma.hbm_to_vmem [thread:$0]  %s2, 512, %s37, [#allocation10], 128, 128, 8
    $region13: #{tpu_custom_call.1} parent=1 // pred_fallthru
      _
    // Predicated region
    $region14: #{tpu_custom_call.1} parent=1 // pred_check
      _
    $region15: #{tpu_custom_call.1} parent=1 // pred_check_branch
      %44 = sbr.rel (0) target = $region17
    $region16: #{tpu_custom_call.1} parent=1 // pred_region
      %s46 = ssub.s32 512, 512
      %47 = vsyncadd [#allocation10], %s46
      %s48 = sshll.u32 [#allocation11], 4
      %s49 = int_to_ptr.vmem [resolvable:$true] %s48
      %54 = dma.hbm_to_vmem [thread:$0]  %s3, 512, %s49, [#allocation10], 128, 128, 8
    $region17: #{tpu_custom_call.1} parent=1 // pred_fallthru
      _
    // Predicated region
    $region18: #{tpu_custom_call.1} parent=1 // pred_check
      _
    $region19: #{tpu_custom_call.1} parent=1 // pred_check_branch
      %56 = sbr.rel (0) target = $region21
    $region20: #{tpu_custom_call.1} parent=1 // pred_region
      %s58 = ssub.s32 512, 512
      %59 = vsyncadd [#allocation13], %s58
      %s60 = sshll.u32 [#allocation12], 4
      %s61 = int_to_ptr.vmem [resolvable:$true] %s60
      %66 = dma.hbm_to_vmem [thread:$0]  %s4, 512, %s61, [#allocation13], 128, 128, 8
    $region21: #{tpu_custom_call.1} parent=1 // pred_fallthru
      _
    // Predicated region
    $region22: #{tpu_custom_call.1} parent=1 // pred_check
      _
    $region23: #{tpu_custom_call.1} parent=1 // pred_check_branch
      %68 = sbr.rel (0) target = $region25
    $region24: #{tpu_custom_call.1} parent=1 // pred_region
      _
    $region25: #{tpu_custom_call.1} parent=1 // pred_fallthru
      _
    // Predicated region
    $region26: #{tpu_custom_call.1} parent=1 // pred_check
      _
    $region27: #{tpu_custom_call.1} parent=1 // pred_check_branch
      %70 = sbr.rel (0) target = $region29
    $region28: #{tpu_custom_call.1} parent=1 // pred_region
      _
    $region29: #{tpu_custom_call.1} parent=1 // pred_fallthru
      _
    // Predicated region
    $region30: #{tpu_custom_call.1} parent=1 // pred_check
      _
    $region31: #{tpu_custom_call.1} parent=1 // pred_check_branch
      %72 = sbr.rel (0) target = $region33
    $region32: #{tpu_custom_call.1} parent=1 // pred_region
      %73 = dma.done [#allocation7], 256
    $region33: #{tpu_custom_call.1} parent=1 // pred_fallthru
      _
    // Predicated region
    $region34: #{tpu_custom_call.1} parent=1 // pred_check
      _
    $region35: #{tpu_custom_call.1} parent=1 // pred_check_branch
      %75 = sbr.rel (0) target = $region37
    $region36: #{tpu_custom_call.1} parent=1 // pred_region
      %76 = dma.done [#allocation10], 512
    $region37: #{tpu_custom_call.1} parent=1 // pred_fallthru
      _
    // Predicated region
    $region38: #{tpu_custom_call.1} parent=1 // pred_check
      _
    $region39: #{tpu_custom_call.1} parent=1 // pred_check_branch
      %78 = sbr.rel (0) target = $region41
    $region40: #{tpu_custom_call.1} parent=1 // pred_region
      %79 = dma.done [#allocation10], 512
    $region41: #{tpu_custom_call.1} parent=1 // pred_fallthru
      _
    // Predicated region
    $region42: #{tpu_custom_call.1} parent=1 // pred_check
      _
    $region43: #{tpu_custom_call.1} parent=1 // pred_check_branch
      %81 = sbr.rel (0) target = $region45
    $region44: #{tpu_custom_call.1} parent=1 // pred_region
      %82 = dma.done [#allocation13], 512
    $region45: #{tpu_custom_call.1} parent=1 // pred_fallthru
      _
    %p83 = scmp.eq.s32.totalorder 0, 0
    // Predicated region
    $region46: #{tpu_custom_call.1} parent=1 // pred_check
      %p84 = pneg %p83
    $region47: #{tpu_custom_call.1} parent=1 // pred_check_branch
      %86 = sbr.rel (%p84) target = $region49
    $region48: #{tpu_custom_call.1} parent=1 // pred_region
      %v87 = vld [vmem:[%s0] sm:$0x3]
      %v88 = vld [vmem:[#allocation9] sm:$0xff]
      %v89 = vld [vmem:[#allocation9 + $0x8] sm:$0xff]
      %v90 = vld [vmem:[#allocation9 + $0x10] sm:$0xff]
      %v91 = vld [vmem:[#allocation9 + $0x18] sm:$0xff]
      %v92 = vld [vmem:[%s5] sm:$0x1]
      %v93 = vlaneseq
      %v94 = vshrl.u32 %v93, 7
      %v95 = vsub.s32 0, %v94
      %v96 = vrot.slane %v92, %v95
      %vm97 = vcmask 261120
      %v99 = vsel %vm97, %v87, 0
      %101 = vmatprep.subr.mxu0 0.0
      %102 = vmatpush1.msra.mxu0 %v88
      %103 = vmatprep.subr.mxu0 0.0
      %104 = vmatpush1.msra.mxu0 %v89
      %105 = vmatprep.subr.mxu0 0.0
      %106 = vmatpush1.msra.mxu0 %v90
      %107 = vmatprep.subr.mxu0 0.0
      %108 = vmatpush1.msra.mxu0 %v91
      %109 = vmatprep.subr.mxu0 0.0
      %110 = vmatpush1.msra.mxu0 0.0
      %111 = vmatprep.subr.mxu0 0.0
      %112 = vmatpush1.msra.mxu0 0.0
      %113 = vmatprep.subr.mxu0 0.0
      %114 = vmatpush1.msra.mxu0 0.0
      %115 = vmatprep.subr.mxu0 0.0
      %116 = vmatpush1.msra.mxu0 0.0
      %117 = vmatprep.subr.mxu0 0.0
      %118 = vmatpush1.msra.mxu0 0.0
      %119 = vmatprep.subr.mxu0 0.0
      %120 = vmatpush1.msra.mxu0 0.0
      %121 = vmatprep.subr.mxu0 0.0
      %122 = vmatpush1.msra.mxu0 0.0
      %123 = vmatprep.subr.mxu0 0.0
      %124 = vmatpush1.msra.mxu0 0.0
      %125 = vmatprep.subr.mxu0 0.0
      %126 = vmatpush1.msra.mxu0 0.0
      %127 = vmatprep.subr.mxu0 0.0
      %128 = vmatpush1.msra.mxu0 0.0
      %129 = vmatprep.subr.mxu0 0.0
      %130 = vmatpush1.msra.mxu0 0.0
      %131 = vmatprep.subr.mxu0 0.0
      %132 = vmatpush1.msra.mxu0 0.0
      %133 = vmatprep.subr.mxu0 0.0
      %134 = vmatpush1.msra.mxu0 0.0
      %135 = vmatprep.subr.mxu0 0.0
      %136 = vmatpush1.msra.mxu0 0.0
      %137 = vmatprep.subr.mxu0 0.0
      %138 = vmatpush1.msra.mxu0 0.0
      %139 = vmatprep.subr.mxu0 0.0
      %140 = vmatpush1.msra.mxu0 0.0
      %141 = vmatprep.subr.mxu0 0.0
      %142 = vmatpush1.msra.mxu0 0.0
      %143 = vmatprep.subr.mxu0 0.0
      %144 = vmatpush1.msra.mxu0 0.0
      %145 = vmatprep.subr.mxu0 0.0
      %146 = vmatpush1.msra.mxu0 0.0
      %147 = vmatprep.subr.mxu0 0.0
      %148 = vmatpush1.msra.mxu0 0.0
      %149 = vmatprep.subr.mxu0 0.0
      %150 = vmatpush1.msra.mxu0 0.0
      %151 = vmatprep.subr.mxu0 0.0
      %152 = vmatpush1.msra.mxu0 0.0
      %153 = vmatprep.subr.mxu0 0.0
      %154 = vmatpush1.msra.mxu0 0.0
      %155 = vmatprep.subr.mxu0 0.0
      %156 = vmatpush1.msra.mxu0 0.0
      %157 = vmatprep.subr.mxu0 0.0
      %158 = vmatpush1.msra.mxu0 0.0
      %159 = vmatprep.subr.mxu0 0.0
      %160 = vmatpush1.msra.mxu0 0.0
      %161 = vmatprep.subr.mxu0 0.0
      %162 = vmatpush1.msra.mxu0 0.0
      %163 = vmatprep.subr.mxu0 0.0
      %164 = vmatpush1.msra.mxu0 0.0
      %165 = vmatprep.mubr.f32.mxu0 0.0
      %166 = vmatmul.mubr.f32.gmra.mrb[0].mxu0 %v99
      %v167 = vpop.f32.mrb[0].mxu0
      %v168 = vadd.f32 %v96, %v167
      %v169 = vpop.f32.mrb[0].mxu0
      %170 = vdwg.mxu0
      %vm171 = vcmask 254976
      %172 = vst.msk [vmem:[#allocation2] sm:$0x3] %vm171, %v168
      %174 = vrot.lane.b32.xlu0 %v168, 96
      %v175 = vpop.permute.xlu0 %174
      %vm177 = vcmask 779264
      %178 = vst.msk [vmem:[#allocation3] sm:$0x3] %vm177, %v175
      %179 = vst.msk [vmem:[#allocation4] sm:$0x3] %vm171, 0.0
    $region49: #{tpu_custom_call.1} parent=1 // pred_fallthru
      _
    %v180 = vld [vmem:[#allocation6] sm:$0xff]
    %v181 = vld [vmem:[#allocation6 + $0x8] sm:$0xff]
    %v182 = vld [vmem:[#allocation11] sm:$0xff]
    %v183 = vld [vmem:[#allocation11 + $0x8] sm:$0xff]
    %v184 = vld [vmem:[#allocation11 + $0x10] sm:$0xff]
    %v185 = vld [vmem:[#allocation11 + $0x18] sm:$0xff]
    %vm186 = vcmask 261120
    %v188 = vsel %vm186, %v180, 0
    %v191 = vsel %vm186, %v181, 0
    %193 = vmatprep.subr.mxu0 0.0
    %194 = vmatpush1.msra.mxu0 %v182
    %195 = vmatprep.subr.mxu0 0.0
    %196 = vmatpush1.msra.mxu0 %v183
    %197 = vmatprep.subr.mxu0 0.0
    %198 = vmatpush1.msra.mxu0 %v184
    %199 = vmatprep.subr.mxu0 0.0
    %200 = vmatpush1.msra.mxu0 %v185
    %201 = vmatprep.subr.mxu0 0.0
    %202 = vmatpush1.msra.mxu0 0.0
    %203 = vmatprep.subr.mxu0 0.0
    %204 = vmatpush1.msra.mxu0 0.0
    %205 = vmatprep.subr.mxu0 0.0
    %206 = vmatpush1.msra.mxu0 0.0
    %207 = vmatprep.subr.mxu0 0.0
    %208 = vmatpush1.msra.mxu0 0.0
    %209 = vmatprep.subr.mxu0 0.0
    %210 = vmatpush1.msra.mxu0 0.0
    %211 = vmatprep.subr.mxu0 0.0
    %212 = vmatpush1.msra.mxu0 0.0
    %213 = vmatprep.subr.mxu0 0.0
    %214 = vmatpush1.msra.mxu0 0.0
    %215 = vmatprep.subr.mxu0 0.0
    %216 = vmatpush1.msra.mxu0 0.0
    %217 = vmatprep.subr.mxu0 0.0
    %218 = vmatpush1.msra.mxu0 0.0
    %219 = vmatprep.subr.mxu0 0.0
    %220 = vmatpush1.msra.mxu0 0.0
    %221 = vmatprep.subr.mxu0 0.0
    %222 = vmatpush1.msra.mxu0 0.0
    %223 = vmatprep.subr.mxu0 0.0
    %224 = vmatpush1.msra.mxu0 0.0
    %225 = vmatprep.subr.mxu0 0.0
    %226 = vmatpush1.msra.mxu0 0.0
    %227 = vmatprep.subr.mxu0 0.0
    %228 = vmatpush1.msra.mxu0 0.0
    %229 = vmatprep.subr.mxu0 0.0
    %230 = vmatpush1.msra.mxu0 0.0
    %231 = vmatprep.subr.mxu0 0.0
    %232 = vmatpush1.msra.mxu0 0.0
    %233 = vmatprep.subr.mxu0 0.0
    %234 = vmatpush1.msra.mxu0 0.0
    %235 = vmatprep.subr.mxu0 0.0
    %236 = vmatpush1.msra.mxu0 0.0
    %237 = vmatprep.subr.mxu0 0.0
    %238 = vmatpush1.msra.mxu0 0.0
    %239 = vmatprep.subr.mxu0 0.0
    %240 = vmatpush1.msra.mxu0 0.0
    %241 = vmatprep.subr.mxu0 0.0
    %242 = vmatpush1.msra.mxu0 0.0
    %243 = vmatprep.subr.mxu0 0.0
    %244 = vmatpush1.msra.mxu0 0.0
    %245 = vmatprep.subr.mxu0 0.0
    %246 = vmatpush1.msra.mxu0 0.0
    %247 = vmatprep.subr.mxu0 0.0
    %248 = vmatpush1.msra.mxu0 0.0
    %249 = vmatprep.subr.mxu0 0.0
    %250 = vmatpush1.msra.mxu0 0.0
    %251 = vmatprep.subr.mxu0 0.0
    %252 = vmatpush1.msra.mxu0 0.0
    %253 = vmatprep.subr.mxu0 0.0
    %254 = vmatpush1.msra.mxu0 0.0
    %255 = vmatprep.subr.mxu0 0.0
    %256 = vmatpush1.msra.mxu0 0.0
    %257 = vmatprep.mubr.f32.mxu0 0.0
    %258 = vmatmul.mubr.f32.gmra.mrb[0].mxu0 %v188
    %v259 = vpop.f32.mrb[0].mxu0
    %v260 = vadd.f32 0.0, %v259
    %v261 = vpop.f32.mrb[0].mxu0
    %262 = vmatprep.mubr.f32.mxu0 0.0
    %263 = vmatmul.mubr.f32.gmra.mrb[0].mxu0 %v191
    %v264 = vpop.f32.mrb[0].mxu0
    %v265 = vadd.f32 0.0, %v264
    %v266 = vpop.f32.mrb[0].mxu0
    %267 = vdwg.mxu0
    %v268 = vld [vmem:[#allocation2] sm:$0x3]
    %v271 = vunpack.c.l.s4 1966171168
    %v272 = vunpack.c.0.s8 %v271
    %v273 = vlaneseq
    %v274 = vshrl.u32 %v273, 7
    %v275 = vsub.s32 %v272, %v274
    %v276 = vrot.slane %v268, %v275
    %v277 = vcombine.high %v276, %v276
    %v279 = vunpack.c.l.s4 1966171168
    %v280 = vunpack.c.0.s8 %v279
    %v281 = vlaneseq
    %v282 = vshrl.u32 %v281, 7
    %v283 = vsub.s32 %v280, %v282
    %v284 = vrot.slane %v276, %v283
    %v286 = vunpack.c.l.s4 1966171168
    %v287 = vunpack.c.0.s8 %v286
    %v288 = vlaneseq
    %v289 = vshrl.u32 %v288, 7
    %v290 = vsub.s32 %v287, %v289
    %v291 = vrot.slane %v277, %v290
    %v292 = vlaneseq
    %v293 = vshrl.u32 %v292, 7
    %v294 = vsub.s32 0, %v293
    %v295 = vrot.slane %v284, %v294
    %v296 = vlaneseq
    %v297 = vshrl.u32 %v296, 7
    %v298 = vsub.s32 0, %v297
    %v299 = vrot.slane %v291, %v298
    %v302 = vadd.f32 %v260, %v295
    %v303 = vadd.f32 %v265, %v299
    %v304 = vtanh.pop %v302
    %v305 = vtanh.pop %v303
    %v306 = vld [vmem:[%s5 + $0x2] sm:$0x1]
    %v307 = vlaneseq
    %v308 = vshrl.u32 %v307, 7
    %v309 = vsub.s32 0, %v308
    %v310 = vrot.slane %v306, %v309
    %v311 = vmul.f32 %v304, %v310
    %v312 = vmul.f32 %v305, %v310
    %v313 = vsel %vm186, %v311, 0.0
    %314 = vadd.xlane.f32.xlu0 %v313
    %v315 = vpop.xlane.xlu0 %314
    %v316 = vsel %vm186, %v312, 0.0
    %317 = vadd.xlane.f32.xlu0 %v316
    %v318 = vpop.xlane.xlu0 %317
    %s319 = sld [smem:[#allocation5]]
    %v320 = vstv %s319
    %v321 = vadd.f32 %v315, %v320
    %v322 = vadd.f32 %v318, %v320
    %v323 = vld [vmem:[#allocation4] sm:$0x3]
    %v324 = vmul.f32 %v321, %v180
    %v325 = vmul.f32 %v322, %v181
    %v326 = vsel %vm186, %v324, 0.0
    %v327 = vrot.slane %v326, 4
    %v328 = vadd.f32 %v326, %v327
    %v329 = vrot.slane %v328, 2
    %v330 = vadd.f32 %v328, %v329
    %v331 = vrot.slane %v330, 1
    %v332 = vadd.f32 %v330, %v331
    %v333 = vsel %vm186, %v325, 0.0
    %v334 = vrot.slane %v333, 4
    %v335 = vadd.f32 %v333, %v334
    %v336 = vrot.slane %v335, 2
    %v337 = vadd.f32 %v335, %v336
    %v338 = vrot.slane %v337, 1
    %v339 = vadd.f32 %v337, %v338
    %vm342 = vcmask 1041409
    %v343 = vsel %vm342, %v339, %v332
    %v345 = vadd.f32 %v323, %v343
    %vm346 = vcmask 254976
    %347 = vst.msk [vmem:[#allocation4] sm:$0x3] %vm346, %v345
    // Predicated region
    $region50: #{tpu_custom_call.1} parent=1 // pred_check
      %p348 = pneg %p83
    $region51: #{tpu_custom_call.1} parent=1 // pred_check_branch
      %350 = sbr.rel (%p348) target = $region53
    $region52: #{tpu_custom_call.1} parent=1 // pred_region
      %v351 = vld [vmem:[#allocation4] sm:$0x3]
      %v352 = vld [vmem:[#allocation12] sm:$0xff]
      %v353 = vld [vmem:[#allocation12 + $0x8] sm:$0xff]
      %v354 = vld [vmem:[#allocation12 + $0x10] sm:$0xff]
      %v355 = vld [vmem:[#allocation12 + $0x18] sm:$0xff]
      %v356 = vld [vmem:[%s5 + $0x1] sm:$0x1]
      %v357 = vlaneseq
      %v358 = vshrl.u32 %v357, 7
      %v359 = vsub.s32 0, %v358
      %v360 = vrot.slane %v356, %v359
      %v362 = vsel %vm186, %v351, 0
      %364 = vmatprep.subr.mxu0 0.0
      %365 = vmatpush1.msra.mxu0 %v352
      %366 = vmatprep.subr.mxu0 0.0
      %367 = vmatpush1.msra.mxu0 %v353
      %368 = vmatprep.subr.mxu0 0.0
      %369 = vmatpush1.msra.mxu0 %v354
      %370 = vmatprep.subr.mxu0 0.0
      %371 = vmatpush1.msra.mxu0 %v355
      %372 = vmatprep.subr.mxu0 0.0
      %373 = vmatpush1.msra.mxu0 0.0
      %374 = vmatprep.subr.mxu0 0.0
      %375 = vmatpush1.msra.mxu0 0.0
      %376 = vmatprep.subr.mxu0 0.0
      %377 = vmatpush1.msra.mxu0 0.0
      %378 = vmatprep.subr.mxu0 0.0
      %379 = vmatpush1.msra.mxu0 0.0
      %380 = vmatprep.subr.mxu0 0.0
      %381 = vmatpush1.msra.mxu0 0.0
      %382 = vmatprep.subr.mxu0 0.0
      %383 = vmatpush1.msra.mxu0 0.0
      %384 = vmatprep.subr.mxu0 0.0
      %385 = vmatpush1.msra.mxu0 0.0
      %386 = vmatprep.subr.mxu0 0.0
      %387 = vmatpush1.msra.mxu0 0.0
      %388 = vmatprep.subr.mxu0 0.0
      %389 = vmatpush1.msra.mxu0 0.0
      %390 = vmatprep.subr.mxu0 0.0
      %391 = vmatpush1.msra.mxu0 0.0
      %392 = vmatprep.subr.mxu0 0.0
      %393 = vmatpush1.msra.mxu0 0.0
      %394 = vmatprep.subr.mxu0 0.0
      %395 = vmatpush1.msra.mxu0 0.0
      %396 = vmatprep.subr.mxu0 0.0
      %397 = vmatpush1.msra.mxu0 0.0
      %398 = vmatprep.subr.mxu0 0.0
      %399 = vmatpush1.msra.mxu0 0.0
      %400 = vmatprep.subr.mxu0 0.0
      %401 = vmatpush1.msra.mxu0 0.0
      %402 = vmatprep.subr.mxu0 0.0
      %403 = vmatpush1.msra.mxu0 0.0
      %404 = vmatprep.subr.mxu0 0.0
      %405 = vmatpush1.msra.mxu0 0.0
      %406 = vmatprep.subr.mxu0 0.0
      %407 = vmatpush1.msra.mxu0 0.0
      %408 = vmatprep.subr.mxu0 0.0
      %409 = vmatpush1.msra.mxu0 0.0
      %410 = vmatprep.subr.mxu0 0.0
      %411 = vmatpush1.msra.mxu0 0.0
      %412 = vmatprep.subr.mxu0 0.0
      %413 = vmatpush1.msra.mxu0 0.0
      %414 = vmatprep.subr.mxu0 0.0
      %415 = vmatpush1.msra.mxu0 0.0
      %416 = vmatprep.subr.mxu0 0.0
      %417 = vmatpush1.msra.mxu0 0.0
      %418 = vmatprep.subr.mxu0 0.0
      %419 = vmatpush1.msra.mxu0 0.0
      %420 = vmatprep.subr.mxu0 0.0
      %421 = vmatpush1.msra.mxu0 0.0
      %422 = vmatprep.subr.mxu0 0.0
      %423 = vmatpush1.msra.mxu0 0.0
      %424 = vmatprep.subr.mxu0 0.0
      %425 = vmatpush1.msra.mxu0 0.0
      %426 = vmatprep.subr.mxu0 0.0
      %427 = vmatpush1.msra.mxu0 0.0
      %428 = vmatprep.mubr.f32.mxu0 0.0
      %429 = vmatmul.mubr.f32.gmra.mrb[0].mxu0 %v362
      %v430 = vpop.f32.mrb[0].mxu0
      %v431 = vadd.f32 %v360, %v430
      %v432 = vpop.f32.mrb[0].mxu0
      %433 = vdwg.mxu0
      %v434 = vld [vmem:[#allocation3] sm:$0x3]
      %v435 = vadd.f32 %v431, %v434
      %v436 = vxor.u32 %v435, 2147483648
      %v437 = vmul.f32 %v436, 1.442695
      %v438 = vpow.pop %v437
      %v439 = vadd.f32 %v438, 1.0
      %v440 = vrcp.pop %v439
      %v441 = vmul.f32 1.0, %v440
      %443 = vrot.lane.b32.xlu0 %v434, 64
      %v444 = vpop.permute.xlu0 %443
      %v446 = vmul.f32 %v441, %v444
      %448 = vrot.lane.b32.xlu0 %v446, 64
      %v449 = vpop.permute.xlu0 %448
      %v451 = vadd.f32 %v431, %v449
      %v452 = vtanh.pop %v451
      %v453 = vsub.f32 1.0, %v441
      %455 = vrot.lane.b32.xlu0 %v452, 96
      %v456 = vpop.permute.xlu0 %455
      %v458 = vmul.f32 %v453, %v456
      %v459 = vld [vmem:[%s0] sm:$0x3]
      %461 = vrot.lane.b32.xlu0 %v459, 32
      %v462 = vpop.permute.xlu0 %461
      %v464 = vmul.f32 %v441, %v462
      %v465 = vadd.f32 %v458, %v464
      %467 = vrot.lane.b32.xlu0 %v465, 96
      %v468 = vpop.permute.xlu0 %467
      %470 = vst.msk [vmem:[#allocation14] sm:$0x3] %vm346, %v468
    $region53: #{tpu_custom_call.1} parent=1 // pred_fallthru
      _
    // Predicated region
    $region54: #{tpu_custom_call.1} parent=1 // pred_check
      _
    $region55: #{tpu_custom_call.1} parent=1 // pred_check_branch
      %472 = sbr.rel (0) target = $region57
    $region56: #{tpu_custom_call.1} parent=1 // pred_region
      %s474 = ssub.s32 32, 32
      %475 = vsyncadd [#allocation8], %s474
      %s477 = sshll.u32 [#allocation14], 4
      %s478 = int_to_ptr.vmem [resolvable:$true] %s477
      %480 = dma.vmem_to_hbm [thread:$0]  %s478, 32, %s7, [#allocation8]
    $region57: #{tpu_custom_call.1} parent=1 // pred_fallthru
      _
    // Predicated region
    $region58: #{tpu_custom_call.1} parent=1 // pred_check
      _
    $region59: #{tpu_custom_call.1} parent=1 // pred_check_branch
      %482 = sbr.rel (0) target = $region61
    $region60: #{tpu_custom_call.1} parent=1 // pred_region
      %483 = dma.done [#allocation8], 32
    $region61: #{tpu_custom_call.1} parent=1 // pred_fallthru
      _
    %484 = vsyncpa [#allocation7], 1
    %485 = vsyncpa [#allocation10], 1
    %486 = vsyncpa [#allocation13], 1
    %487 = vsyncpa [#allocation8], 1

</llo_original>
